<compile_context>
chip_gen: v7x
topology: tpu7x:2x2x1
jax: 0.10.0
libtpu: 0.0.40
codegen_flags: <defaults>
</compile_context>

<pallas_src>
import functools

import jax
import jax.numpy as jnp
from jax.experimental import pallas as pl
from jax.experimental.pallas import tpu as pltpu

_MIB = 1 << 20


def _softshrink(x, lambd):
    return jnp.where(x > lambd, x - lambd,
                     jnp.where(x < -lambd, x + lambd, jnp.zeros_like(x)))


# --------------------------------------------------------------------------- #
# Kernels
# --------------------------------------------------------------------------- #
def _make_simple_kernel(lambd):
    """Single K-resident dot: out = softshrink(X @ W + bias)."""

    def kernel(x_ref, w_ref, b_ref, out_ref):
        acc = jnp.dot(x_ref[...], w_ref[...], preferred_element_type=jnp.float32)
        out_ref[...] = _softshrink(acc + b_ref[...], lambd).astype(out_ref.dtype)

    return kernel


def _make_ktiled_kernel(lambd):
    """K-tiled dot with f32 VMEM accumulator (weight-dominated / large D)."""

    def kernel(x_ref, w_ref, b_ref, out_ref, acc_ref):
        k = pl.program_id(1)

        @pl.when(k == 0)
        def _init():
            acc_ref[...] = jnp.zeros_like(acc_ref)

        acc_ref[...] += jnp.dot(x_ref[...], w_ref[...],
                                preferred_element_type=jnp.float32)

        @pl.when(k == pl.num_programs(1) - 1)
        def _finalize():
            out_ref[...] = _softshrink(acc_ref[...] + b_ref[...],
                                       lambd).astype(out_ref.dtype)

    return kernel


# --------------------------------------------------------------------------- #
# One-time capability / hardware probes
# --------------------------------------------------------------------------- #
@functools.lru_cache(maxsize=None)
def _supports_buffered_one():
    """Can grid-invariant blocks be single-buffered (pipeline_mode=Buffered(1))?"""
    try:
        inv_spec = pl.BlockSpec((8, 128), lambda i: (0, 0),
                                pipeline_mode=pl.Buffered(1))
    except (TypeError, AttributeError):
        return False

    def _probe_kernel(x_ref, o_ref):
        o_ref[...] = x_ref[...] + 1.0

    try:
        fn = pl.pallas_call(
            _probe_kernel,
            out_shape=jax.ShapeDtypeStruct((16, 128), jnp.float32),
            grid_spec=pltpu.PrefetchScalarGridSpec(
                num_scalar_prefetch=0,
                grid=(2,),
                in_specs=[inv_spec],
                out_specs=pl.BlockSpec((8, 128), lambda i: (i, 0))),
        )
        jax.block_until_ready(fn(jnp.zeros((8, 128), jnp.float32)))
        return True
    except Exception:  # probe only: any failure simply disables the optimization
        return False


def _tpu_vmem_capacity_bytes():
    try:
        return int(pltpu.get_tpu_info().vmem_capacity_bytes)
    except Exception:  # hardware-info query only; fall back to conservative defaults
        return None


# --------------------------------------------------------------------------- #
# Parameter preparation (done once, outside the per-call path)
# --------------------------------------------------------------------------- #
def _stacked_weight(wr, wi, conj, compute_dtype):
    """(2D, 2D) weight acting on [real | imag] rows -> [real | imag] cols.

    mid  (conj=False): real = xr@WR - xi@WI ; imag = xr@WI + xi@WR
    side (conj=True) : real = xr@WR + xi@WI ; imag = xr@WI - xi@WR
    """
    top = jnp.concatenate([wr, wi], axis=1)           # xr contribution
    if conj:
        bot = jnp.concatenate([wi, -wr], axis=1)      # xi contribution (conj)
    else:
        bot = jnp.concatenate([-wi, wr], axis=1)
    return jnp.concatenate([top, bot], axis=0).astype(compute_dtype)


def prepare_window_params(params, *, use_right=True, use_left=True,
                          compute_dtype=jnp.bfloat16):
    """Pre-stack / pre-cast the weights and bias once for a fixed source pattern."""
    D = params["BiasR"].shape[-1]
    D2 = 2 * D
    n_out = D2 if D2 >= 128 else 128          # lane-dense output columns

    blocks = [_stacked_weight(params["WR_self"], params["WI_self"], False,
                              compute_dtype)]
    if use_right:
        blocks.append(_stacked_weight(params["WR_right"], params["WI_right"],
                                      True, compute_dtype))
    if use_left:
        blocks.append(_stacked_weight(params["WR_left"], params["WI_left"],
                                      True, compute_dtype))
    w = jnp.concatenate(blocks, axis=0)       # (n_src*2D, 2D)

    bias = jnp.concatenate([params["BiasR"], params["BiasI"]]).astype(jnp.float32)
    if n_out != D2:
        w = jnp.pad(w, ((0, 0), (0, n_out - D2)))
        bias = jnp.pad(bias, (0, n_out - D2))
    bias = bias.reshape(1, n_out)

    return {
        "w": w, "bias": bias,
        "embed_size": D, "n_out": n_out,
        "n_src": len(blocks),
        "use_right": use_right, "use_left": use_left,
        "compute_dtype": jnp.dtype(compute_dtype),
    }


# --------------------------------------------------------------------------- #
# Forward pass
# --------------------------------------------------------------------------- #
def window_layer_pallas(mid, right=None, left=None, params=None,
                        sparsity_threshold=0.01, *, prepared=None,
                        compute_dtype=jnp.bfloat16, return_planes=False):
    """Pallas forward pass of WindowLayer.

    mid/right/left: complex64 arrays of shape (B, N, D); right/left optional.
    Returns complex64 (B, N, D), or f32 [real | imag] planes if return_planes.
    """
    B, N, D = mid.shape
    D2 = 2 * D
    M = B * N

    if prepared is None:
        prepared = prepare_window_params(
            params, use_right=right is not None, use_left=left is not None,
            compute_dtype=compute_dtype)
    assert prepared["embed_size"] == D
    assert prepared["use_right"] == (right is not None)
    assert prepared["use_left"] == (left is not None)

    cdt = prepared["compute_dtype"]
    n_out = prepared["n_out"]
    w_full = prepared["w"]
    bias = prepared["bias"]

    # ----- build the single K-stacked bf16 input plane ----------------------
    # TODO(synk): a complex64 -> f32 bitcast view would avoid this XLA
    # deinterleave pass entirely, but lax.bitcast_convert_type rejects complex.
    sources = [mid] + ([right] if right is not None else []) \
                    + ([left] if left is not None else [])
    parts = []
    for x in sources:
        parts.append(jnp.real(x).reshape(M, D).astype(cdt))
        parts.append(jnp.imag(x).reshape(M, D).astype(cdt))
    x_stacked = jnp.concatenate(parts, axis=-1)          # (M, n_src*2D) bf16
    K = x_stacked.shape[-1]

    # ----- generation-aware VMEM budget --------------------------------------
    itemsize = jnp.dtype(cdt).itemsize
    vmem_cap = _tpu_vmem_capacity_bytes()
    small_vmem = True if vmem_cap is None else vmem_cap <= 64 * _MIB
    if small_vmem:                 # v7x-like: 64 MiB / TC, 2 TensorCores
        tile_budget, vmem_cap_limit, target_steps = 28 * _MIB, 48 * _MIB, 4
    else:                          # v5e / v6e: 128 MiB, single TensorCore
        tile_budget, vmem_cap_limit, target_steps = 88 * _MIB, 100 * _MIB, 3

    buffered_one = _supports_buffered_one()
    w_buffers_inv = 1 if buffered_one else 2
    w_total_bytes = K * n_out * itemsize

    # K-tile the stacked weights when they would dominate the VMEM budget.
    use_k_tiling, tk = False, K
    if w_buffers_inv * w_total_bytes > tile_budget // 3:
        for cand in (2048, 1024, 512, 256):
            if cand < K and K % cand == 0:
                tk, use_k_tiling = cand, True
                break
        # TODO(synk): if K has no 128-multiple divisor we fall back to a
        # fully-resident weight (ragged K-tiles would need masking).

    def tile_bytes(t):
        w_b = (2 if use_k_tiling else w_buffers_inv) * tk * n_out * itemsize
        x_b = 2 * t * tk * itemsize                       # double-buffered input
        o_b = 2 * t * n_out * 4                           # double-buffered f32 out
        a_b = t * n_out * 4 * (2 if use_k_tiling else 1)  # f32 acc + elementwise tmp
        return w_b + x_b + o_b + a_b + 4 * n_out

    # ----- row-tile selection -------------------------------------------------
    cands = [t for t in (2048, 1536, 1024, 768, 512, 384, 256, 192, 128, 96,
                         64, 48, 32, 24, 16, 8)
             if t <= M and tile_bytes(t) <= tile_budget]
    if not cands:
        tm = min(M, 8)
    else:
        def pref(t):
            steps = pl.cdiv(M, t)
            # enough steps for pipelining (and both v7x cores) first, then the
            # fewest such steps (biggest tiles), then the least ragged waste.
            return (steps >= target_steps, -steps, -t)
        tm = max(cands, key=pref)

    vmem_limit = int(min(vmem_cap_limit,
                         max(32 * _MIB, tile_bytes(tm) + 4 * _MIB)))

    # ----- specs / grid -------------------------------------------------------
    lambd = float(sparsity_threshold)
    grid_m = pl.cdiv(M, tm)
    out_shape = jax.ShapeDtypeStruct((M, n_out), jnp.float32)

    if use_k_tiling:
        grid = (grid_m, K // tk)
        in_specs = [pl.BlockSpec((tm, tk), lambda i, k: (i, k)),
                    pl.BlockSpec((tk, n_out), lambda i, k: (k, 0)),
                    pl.BlockSpec((1, n_out), lambda i, k: (0, 0))]
        out_specs = pl.BlockSpec((tm, n_out), lambda i, k: (i, 0))
        scratch = [pltpu.VMEM((tm, n_out), jnp.float32)]
        kernel = _make_ktiled_kernel(lambd)
        dims = ("parallel", "arbitrary")
    else:
        grid = (grid_m,)
        if buffered_one:
            w_spec = pl.BlockSpec((K, n_out), lambda i: (0, 0),
                                  pipeline_mode=pl.Buffered(1))
            b_spec = pl.BlockSpec((1, n_out), lambda i: (0, 0),
                                  pipeline_mode=pl.Buffered(1))
        else:
            w_spec = pl.BlockSpec((K, n_out), lambda i: (0, 0))
            b_spec = pl.BlockSpec((1, n_out), lambda i: (0, 0))
        in_specs = [pl.BlockSpec((tm, K), lambda i: (i, 0)), w_spec, b_spec]
        out_specs = pl.BlockSpec((tm, n_out), lambda i: (i, 0))
        scratch = []
        kernel = _make_simple_kernel(lambd)
        dims = ("parallel",)

    out = pl.pallas_call(
        kernel,
        out_shape=out_shape,
        grid_spec=pltpu.PrefetchScalarGridSpec(
            num_scalar_prefetch=0,
            grid=grid,
            in_specs=in_specs,
            out_specs=out_specs,
            scratch_shapes=scratch),
        compiler_params=pltpu.CompilerParams(
            dimension_semantics=dims,
            vmem_limit_bytes=vmem_limit),
    )(x_stacked, w_full, bias)

    out = out.reshape(B, N, n_out)
    if return_planes:
        # Blocked [real | imag] f32 planes for a stacked-WindowLayer consumer
        # (skips the complex re-interleave HBM pass).
        return out[..., :D2] if n_out != D2 else out
    return jax.lax.complex(out[..., :D], out[..., D:D2])   # complex64 (B, N, D)


# --------------------------------------------------------------------------- #
# Parameter init + pure-JAX reference
# --------------------------------------------------------------------------- #
def init_params(embed_size, scale, key):
    ks = jax.random.split(key, 8)
    D = embed_size
    return {
        "WR_self": scale * jax.random.normal(ks[0], (D, D), jnp.float32),
        "WI_self": scale * jax.random.normal(ks[1], (D, D), jnp.float32),
        "WR_right": scale * jax.random.normal(ks[2], (D, D), jnp.float32),
        "WI_right": scale * jax.random.normal(ks[3], (D, D), jnp.float32),
        "WR_left": scale * jax.random.normal(ks[4], (D, D), jnp.float32),
        "WI_left": scale * jax.random.normal(ks[5], (D, D), jnp.float32),
        "BiasR": scale * jax.random.normal(ks[6], (D,), jnp.float32),
        "BiasI": scale * jax.random.normal(ks[7], (D,), jnp.float32),
    }


def _reference(mid, right, left, params, lambd, compute_dtype=jnp.float32):
    # Pure-JAX reference; operands rounded to the kernel's compute dtype so the
    # comparison isolates kernel correctness (bf16 is a deliberate MXU choice).
    def cast(v):
        return v.astype(compute_dtype).astype(jnp.float32)

    def proj(x, wr, wi, conj):
        if x is None:
            return 0.0, 0.0
        xr, xi = cast(jnp.real(x)), cast(jnp.imag(x))
        if conj:
            xi = -xi
        wr, wi = cast(wr), cast(wi)
        return xr @ wr - xi @ wi, xr @ wi + xi @ wr

    sr, si = proj(mid, params["WR_self"], params["WI_self"], False)
    rr, ri = proj(right, params["WR_right"], params["WI_right"], True)
    lr, li = proj(left, params["WR_left"], params["WI_left"], True)
    tr = _softshrink(sr + rr + lr + params["BiasR"], lambd)
    ti = _softshrink(si + ri + li + params["BiasI"], lambd)
    return (tr + 1j * ti).astype(jnp.complex64)


if __name__ == "__main__":
    key = jax.random.PRNGKey(0)
    B, N, D = 2, 8, 32
    sparsity_threshold = 0.01
    scale = 0.02

    k_p, k_m, k_r, k_l = jax.random.split(key, 4)
    params = init_params(D, scale, k_p)

    def make_complex(k):
        kr, ki = jax.random.split(k)
        return (jax.random.normal(kr, (B, N, D), jnp.float32)
                + 1j * jax.random.normal(ki, (B, N, D), jnp.float32)
                ).astype(jnp.complex64)

    mid = make_complex(k_m)
    right = make_complex(k_r)
    left = make_complex(k_l)

    # Weights pre-stacked / pre-cast once and reused across calls.
    prepared = prepare_window_params(params, use_right=True, use_left=True)

    # Full three-source window.
    y = window_layer_pallas(mid, right, left, params, sparsity_threshold,
                            prepared=prepared)
    y = jax.block_until_ready(y)
    y_ref = _reference(mid, right, left, params, sparsity_threshold, jnp.bfloat16)
    assert y.shape == (B, N, D) and y.dtype == jnp.complex64
    assert jnp.allclose(y, y_ref, atol=1e-4, rtol=1e-4), \
        float(jnp.max(jnp.abs(y - y_ref)))

    # Degenerate call (right/left absent) exercises the specialized 1-source path
    # (params auto-prepared for that pattern).
    y_mid = window_layer_pallas(mid, None, None, params, sparsity_threshold)
    y_mid = jax.block_until_ready(y_mid)
    y_mid_ref = _reference(mid, None, None, params, sparsity_threshold,
                           jnp.bfloat16)
    assert jnp.allclose(y_mid, y_mid_ref, atol=1e-4, rtol=1e-4), \
        float(jnp.max(jnp.abs(y_mid - y_mid_ref)))

    print("KERNEL_OK")
</pallas_src>

<mosaic_0001>
module attributes {stable_mosaic.version = 11 : i64} {
  func.func @_probe_kernel(%arg0: i32, %arg1: memref<8x128xf32, #tpu.memory_space<vmem>>, %arg2: memref<8x128xf32, #tpu.memory_space<vmem>>) attributes {dimension_semantics = [#tpu.dimension_semantics<arbitrary>], iteration_bounds = array<i64: 2>, scalar_prefetch = 0 : i64, scratch_operands = 0 : i64, tpu.core_type = #tpu.core_type<tc>, window_params = [{pipeline_mode = #tpu.pipeline_mode<synchronous>, transform_indices = @transform_0, window_bounds = array<i64: 8, 128>}, {transform_indices = @transform_1, window_bounds = array<i64: 8, 128>}]} {
    %c0 = arith.constant 0 : index
    %c0_0 = arith.constant 0 : index
    %0 = vector.load %arg1[%c0, %c0_0] : memref<8x128xf32, #tpu.memory_space<vmem>>, vector<8x128xf32>
    %cst = arith.constant 1.000000e+00 : f32
    %1 = vector.broadcast %cst : f32 to vector<8x128xf32>
    %2 = arith.addf %0, %1 : vector<8x128xf32>
    %c0_1 = arith.constant 0 : index
    %c0_2 = arith.constant 0 : index
    %3 = vector.load %arg2[%c0_1, %c0_2] : memref<8x128xf32, #tpu.memory_space<vmem>>, vector<8x128xf32>
    tpu.vector_store %arg2[%c0_1, %c0_2], %2 {strides = array<i32>} : memref<8x128xf32, #tpu.memory_space<vmem>>, vector<8x128xf32>,
    return
  }
  func.func @transform_0(%arg0: i32) -> (i32, i32) {
    %c0_i32 = arith.constant 0 : i32
    %c0_i32_0 = arith.constant 0 : i32
    %c0_i32_1 = arith.constant 0 : i32
    return %c0_i32, %c0_i32_0 : i32, i32
  }
  func.func @transform_1(%arg0: i32) -> (i32, i32) {
    %c0_i32 = arith.constant 0 : i32
    %c0_i32_0 = arith.constant 0 : i32
    return %arg0, %c0_i32 : i32, i32
  }
}

module attributes {stable_mosaic.version = 11 : i64} {
  func.func @kernel(%arg0: i32, %arg1: memref<16x192xbf16, #tpu.memory_space<vmem>>, %arg2: memref<192x128xbf16, #tpu.memory_space<vmem>>, %arg3: memref<1x128xf32, #tpu.memory_space<vmem>>, %arg4: memref<16x128xf32, #tpu.memory_space<vmem>>) attributes {dimension_semantics = [#tpu.dimension_semantics<parallel>], iteration_bounds = array<i64: 1>, scalar_prefetch = 0 : i64, scratch_operands = 0 : i64, tpu.core_type = #tpu.core_type<tc>, window_params = [{transform_indices = @transform_0, window_bounds = array<i64: 16, 192>}, {pipeline_mode = #tpu.pipeline_mode<synchronous>, transform_indices = @transform_1, window_bounds = array<i64: 192, 128>}, {pipeline_mode = #tpu.pipeline_mode<synchronous>, transform_indices = @transform_2, window_bounds = array<i64: 1, 128>}, {transform_indices = @transform_3, window_bounds = array<i64: 16, 128>}]} {
    %c0 = arith.constant 0 : index
    %c0_0 = arith.constant 0 : index
    %0 = vector.load %arg1[%c0, %c0_0] : memref<16x192xbf16, #tpu.memory_space<vmem>>, vector<16x192xbf16>
    %c0_1 = arith.constant 0 : index
    %c0_2 = arith.constant 0 : index
    %1 = vector.load %arg2[%c0_1, %c0_2] : memref<192x128xbf16, #tpu.memory_space<vmem>>, vector<192x128xbf16>
    %cst = arith.constant dense<0.000000e+00> : vector<16x128xf32>
    %2 = tpu.matmul %0, %1, %cst {dimension_numbers = #tpu.dot_dimension_numbers<[1], [0], [0], [1], [0, 0, 1, 1], [], []>} : vector<16x192xbf16>, vector<192x128xbf16>, vector<16x128xf32> -> vector<16x128xf32>
    %c0_3 = arith.constant 0 : index
    %c0_4 = arith.constant 0 : index
    %3 = vector.load %arg3[%c0_3, %c0_4] : memref<1x128xf32, #tpu.memory_space<vmem>>, vector<1x128xf32>
    %4 = vector.broadcast %3 : vector<1x128xf32> to vector<16x128xf32>
    %5 = arith.addf %2, %4 : vector<16x128xf32>
    %cst_5 = arith.constant 0.00999999977 : f32
    %6 = vector.broadcast %cst_5 : f32 to vector<16x128xf32>
    %7 = arith.cmpf ogt, %5, %6 : vector<16x128xf32>
    %cst_6 = arith.constant 0.00999999977 : f32
    %8 = vector.broadcast %cst_6 : f32 to vector<16x128xf32>
    %9 = arith.subf %5, %8 : vector<16x128xf32>
    %cst_7 = arith.constant -0.00999999977 : f32
    %10 = vector.broadcast %cst_7 : f32 to vector<16x128xf32>
    %11 = arith.cmpf olt, %5, %10 : vector<16x128xf32>
    %cst_8 = arith.constant 0.00999999977 : f32
    %12 = vector.broadcast %cst_8 : f32 to vector<16x128xf32>
    %13 = arith.addf %5, %12 : vector<16x128xf32>
    %cst_9 = arith.constant 0.000000e+00 : f32
    %14 = vector.broadcast %cst_9 : f32 to vector<16x128xf32>
    %15 = arith.select %11, %13, %14 : vector<16x128xi1>, vector<16x128xf32>
    %16 = arith.select %7, %9, %15 : vector<16x128xi1>, vector<16x128xf32>
    %c0_10 = arith.constant 0 : index
    %c0_11 = arith.constant 0 : index
    %17 = vector.load %arg4[%c0_10, %c0_11] : memref<16x128xf32, #tpu.memory_space<vmem>>, vector<16x128xf32>
    tpu.vector_store %arg4[%c0_10, %c0_11], %16 {strides = array<i32>} : memref<16x128xf32, #tpu.memory_space<vmem>>, vector<16x128xf32>,
    return
  }
  func.func @transform_0(%arg0: i32) -> (i32, i32) {
    %c0_i32 = arith.constant 0 : i32
    %c0_i32_0 = arith.constant 0 : i32
    return %arg0, %c0_i32 : i32, i32
  }
  func.func @transform_1(%arg0: i32) -> (i32, i32) {
    %c0_i32 = arith.constant 0 : i32
    %c0_i32_0 = arith.constant 0 : i32
    %c0_i32_1 = arith.constant 0 : i32
    return %c0_i32, %c0_i32_0 : i32, i32
  }
  func.func @transform_2(%arg0: i32) -> (i32, i32) {
    %c0_i32 = arith.constant 0 : i32
    %c0_i32_0 = arith.constant 0 : i32
    %c0_i32_1 = arith.constant 0 : i32
    return %c0_i32, %c0_i32_0 : i32, i32
  }
  func.func @transform_3(%arg0: i32) -> (i32, i32) {
    %c0_i32 = arith.constant 0 : i32
    %c0_i32_0 = arith.constant 0 : i32
    return %arg0, %c0_i32 : i32, i32
  }
}

</mosaic_0001>

<llo_original>
// kernel: tpu_custom_call.1
$region0: #{tpu_custom_call.1}
  #allocation0 [shape = 'u32[]', space=smem, size = 0x4, offset = 0x4, fixed_abs, tag = 'smem constant byte address 0x4 - core index']
  #allocation1 [shape = 'u32[144,128]{1,0:T(1,128)}', space=vmem, size = 0x12000, scoped, tag = 'internal scratch']
  %s0 = inlined_call_operand.hbm [shape: f32[8,128], index: 0, kind: input, shape index: {}]
  %s1 = inlined_call_operand.hbm [shape: f32[16,128], index: 1, kind: output, shape index: {}]
  %s2 = sld [smem:[#allocation0]]
  $region41: #{tpu_custom_call.1} parent=0
    _
  %s4 = ssub.s32 1, %s2
  %s5 = scalar_select 0, %s4, %s2
  $region1: #{tpu_custom_call.1} parent=0
    #allocation2 [shape = 'u8[4096]{0}', space=vmem, size = 0x1000, scoped, tag = 'input window, operand 0, single buffered']
    #allocation3 [shape = 's32[2]{0}', space=sflag, size = 0x8, scoped, tag = 'scoped memory for tpu_custom_call.1']
    #allocation4 [shape = 's32[2]{0}', space=sflag, size = 0x8, scoped, tag = 'scoped memory for tpu_custom_call.1']
    #allocation5 [shape = 'u8[8192]{0}', space=vmem, size = 0x2000, scoped, tag = 'output window, operand 0']
    %6 = vsyncpa [#allocation3], 0
    %7 = vsyncpa [#allocation4], 0
    %s8 = scalar_lea.sflag [#allocation4], 1
    %9 = vsyncpa %s8, 0
    loop: start=0, step=1, limit=4
    $region2: #{tpu_custom_call.1} parent=1 // loop_pre_header
      _
    $region3: #{tpu_custom_call.1} parent=1 // loop_header
      %s11 = sphi 0, %s15
      %p12 = scmp.ge.s32.totalorder %s11, 4
      %s19 = sphi 0, %s19
      %s21 = sphi 0, %s19
      %s22 = sphi 0, %s21
      %s36 = sphi 0, %s22
      %s42 = sphi 0, %s44
      %s45 = sphi 0, %s42
      %s46 = sphi 0, %s45
      %s62 = sphi 0, %s46
    $region4: #{tpu_custom_call.1} parent=1 // loop_header_branch
      %14 = sbr.rel (%p12) target = $region8
    $region5: #{tpu_custom_call.1} parent=1 // loop_body
      %s16 = ssub.s32 %s11, 1
      %s17 = ssub.s32 %s11, 2
      %s18 = sadd.s32 %s11, 1
      %s20 = sadd.s32 %s19, 1
      %p23 = scmp.eq.s32.totalorder %s11, 1
      %p24 = scmp.ne.s32.totalorder %s19, %s21
      %p25 = scmp.eq.s32.totalorder %s11, 0
      %p26 = por %p24, %p25
      %p27 = scmp.ne.s32.totalorder %s19, %s21
      %p28 = scmp.eq.s32.totalorder %s16, 1
      %p29 = por %p27, %p28
      %p30 = scmp.ne.s32.totalorder %s21, %s22
      %p31 = scmp.eq.s32.totalorder %s16, 0
      %p32 = por %p30, %p31
      %p33 = scmp.ne.s32.totalorder %s21, %s22
      %p34 = scmp.eq.s32.totalorder %s17, 1
      %p35 = por %p33, %p34
      %p37 = scmp.ne.s32.totalorder %s22, %s36
      %p38 = scmp.eq.s32.totalorder %s17, 0
      %p39 = por %p37, %p38
      %s40 = ssub.s32 %s11, %s18
      %p41 = scmp.eq.s32.totalorder %s40, 0
      %s43 = sadd.s32 %s42, 1
      %s44 = scalar_select %p41, %s42, %s43
      %p47 = pneg %p41
      %p48 = scmp.eq.s32.totalorder %s11, 1
      %p49 = por %p47, %p48
      %p50 = scmp.ne.s32.totalorder %s42, %s45
      %p51 = scmp.eq.s32.totalorder %s11, 0
      %p52 = por %p50, %p51
      %p53 = scmp.ne.s32.totalorder %s42, %s45
      %p54 = scmp.eq.s32.totalorder %s16, 1
      %p55 = por %p53, %p54
      %p56 = scmp.ne.s32.totalorder %s45, %s46
      %p57 = scmp.eq.s32.totalorder %s16, 0
      %p58 = por %p56, %p57
      %p59 = scmp.ne.s32.totalorder %s45, %s46
      %p60 = scmp.eq.s32.totalorder %s17, 1
      %p61 = por %p59, %p60
      %p63 = scmp.ne.s32.totalorder %s46, %s62
      %p64 = scmp.eq.s32.totalorder %s17, 0
      %p65 = por %p63, %p64
      %p66 = scmp.le.s32.totalorder 1, %s11
      %p67 = scmp.lt.s32.totalorder %s11, 3
      %p68 = pnand %p66, %p67
      %p69 = pneg %p68
      // Predicated region
      $region9: #{tpu_custom_call.1} parent=5 // pred_check
        _
      $region10: #{tpu_custom_call.1} parent=5 // pred_check_branch
        %71 = sbr.rel (%p68) target = $region12
      $region11: #{tpu_custom_call.1} parent=5 // pred_region
        %s72 = ssub.s32 %s11, 1
        // Predicated region
        $region13: #{tpu_custom_call.1} parent=11 // pred_check
          %p73 = pneg %p32
        $region14: #{tpu_custom_call.1} parent=11 // pred_check_branch
          %75 = sbr.rel (%p73) target = $region16
        $region15: #{tpu_custom_call.1} parent=11 // pred_region
          %s77 = ssub.s32 128, 128
          %78 = vsyncadd [#allocation3], %s77
          %s80 = sshll.u32 [#allocation2], 4
          %s81 = int_to_ptr.vmem [resolvable:$true] %s80
          %83 = dma.hbm_to_vmem [thread:$0]  %s0, 128, %s81, [#allocation3]
        $region16: #{tpu_custom_call.1} parent=11 // pred_fallthru
          _
      $region12: #{tpu_custom_call.1} parent=5 // pred_fallthru
        _
      %p84 = scmp.lt.s32.totalorder %s11, 2
      // Predicated region
      $region17: #{tpu_custom_call.1} parent=5 // pred_check
        %p85 = pneg %p84
      $region18: #{tpu_custom_call.1} parent=5 // pred_check_branch
        %87 = sbr.rel (%p85) target = $region20
      $region19: #{tpu_custom_call.1} parent=5 // pred_region
        _
      $region20: #{tpu_custom_call.1} parent=5 // pred_fallthru
        _
      %p88 = scmp.le.s32.totalorder 1, %s11
      %p89 = scmp.lt.s32.totalorder %s11, 3
      %p90 = pnand %p88, %p89
      %p91 = pneg %p90
      // Predicated region
      $region21: #{tpu_custom_call.1} parent=5 // pred_check
        _
      $region22: #{tpu_custom_call.1} parent=5 // pred_check_branch
        %93 = sbr.rel (%p90) target = $region24
      $region23: #{tpu_custom_call.1} parent=5 // pred_region
        %s94 = ssub.s32 %s11, 1
        // Predicated region
        $region25: #{tpu_custom_call.1} parent=23 // pred_check
          %p95 = pneg %p32
        $region26: #{tpu_custom_call.1} parent=23 // pred_check_branch
          %97 = sbr.rel (%p95) target = $region28
        $region27: #{tpu_custom_call.1} parent=23 // pred_region
          %98 = dma.done [#allocation3], 128
        $region28: #{tpu_custom_call.1} parent=23 // pred_fallthru
          _
        %p99 = pneg %p32
        %p100 = pneg %p29
        %p101 = pneg %p58
        %p102 = pneg %p55
        %s103 = sand.u32 %s45, 1
        %s104 = scalar_lea.sflag [#allocation4], %s103
        %s105 = sand.u32 %s45, 1
        %s106 = smul.addr %s105, 8
        %s107 = scalar_lea.vmem [#allocation5], %s106
        %v108 = vld [vmem:[#allocation2] sm:$0xff]
        %v109 = vadd.f32 %v108, 1.0
        %110 = vst [vmem:[%s107] sm:$0xff] %v109
        %s111 = sand.u32 %s45, 1
        %s112 = scalar_lea.sflag [#allocation4], %s111
        %s113 = sand.u32 %s45, 1
        %s114 = smul.addr %s113, 8
        %s115 = scalar_lea.vmem [#allocation5], %s114
        // Predicated region
        $region29: #{tpu_custom_call.1} parent=23 // pred_check
          %p116 = pneg %p55
        $region30: #{tpu_custom_call.1} parent=23 // pred_check_branch
          %118 = sbr.rel (%p116) target = $region32
        $region31: #{tpu_custom_call.1} parent=23 // pred_region
          %s120 = ssub.s32 128, 128
          %121 = vsyncadd %s112, %s120
          %s122 = smul.addr %s16, 128
          %s123 = scalar_lea.hbm %s1, %s122
          %s125 = sshll.u32 %s115, 4
          %s126 = int_to_ptr.vmem [resolvable:$true] %s125
          %128 = dma.vmem_to_hbm [thread:$0]  %s126, 128, %s123, %s112
        $region32: #{tpu_custom_call.1} parent=23 // pred_fallthru
          _
      $region24: #{tpu_custom_call.1} parent=5 // pred_fallthru
        _
      %p129 = scmp.le.s32.totalorder 2, %s11
      // Predicated region
      $region33: #{tpu_custom_call.1} parent=5 // pred_check
        %p130 = pneg %p129
      $region34: #{tpu_custom_call.1} parent=5 // pred_check_branch
        %132 = sbr.rel (%p130) target = $region36
      $region35: #{tpu_custom_call.1} parent=5 // pred_region
        %s133 = ssub.s32 %s11, 2
        // Predicated region
        $region37: #{tpu_custom_call.1} parent=35 // pred_check
          %p134 = pneg %p61
        $region38: #{tpu_custom_call.1} parent=35 // pred_check_branch
          %136 = sbr.rel (%p134) target = $region40
        $region39: #{tpu_custom_call.1} parent=35 // pred_region
          %s137 = sand.u32 %s46, 1
          %s138 = scalar_lea.sflag [#allocation4], %s137
          %s139 = sand.u32 %s46, 1
          %s140 = smul.addr %s139, 8
          %s141 = scalar_lea.vmem [#allocation5], %s140
          %142 = dma.done %s138, 128
        $region40: #{tpu_custom_call.1} parent=35 // pred_fallthru
          _
      $region36: #{tpu_custom_call.1} parent=5 // pred_fallthru
        _
    $region6: #{tpu_custom_call.1} parent=1 // loop_footer
      %s15 = sadd.s32 1, %s11
    $region7: #{tpu_custom_call.1} parent=1 // loop_footer_branch
      %10 = sbr.rel target = $region3
    $region8: #{tpu_custom_call.1} parent=1 // loop_exit
      _
    %143 = vsyncpa [#allocation3], 1
    %s144 = scalar_lea.sflag [#allocation3], 1
    %145 = vsyncpa %s144, 1
    %146 = vsyncpa [#allocation4], 1
    %s147 = scalar_lea.sflag [#allocation4], 1
    %148 = vsyncpa %s147, 1

// kernel: tpu_custom_call.1
$region0: #{tpu_custom_call.1}
  #allocation0 [shape = 'u32[]', space=smem, size = 0x4, offset = 0x4, fixed_abs, tag = 'smem constant byte address 0x4 - core index']
  #allocation1 [shape = 'u32[144,128]{1,0:T(1,128)}', space=vmem, size = 0x12000, scoped, tag = 'internal scratch']
  %s0 = inlined_call_operand.hbm [shape: bf16[16,192], index: 0, kind: input, shape index: {}]
  %s1 = inlined_call_operand.hbm [shape: bf16[192,128], index: 1, kind: input, shape index: {}]
  %s2 = inlined_call_operand.vmem [shape: f32[1,128], index: 2, kind: input, shape index: {}]
  %s3 = inlined_call_operand.hbm [shape: f32[16,128], index: 3, kind: output, shape index: {}]
  %s4 = sld [smem:[#allocation0]]
  $region30: #{tpu_custom_call.1} parent=0
    _
  %s6 = ssub.s32 1, %s4
  %s7 = scalar_select 0, %s6, %s4
  $region1: #{tpu_custom_call.1} parent=0
    #allocation2 [shape = 'u8[8192]{0}', space=vmem, size = 0x2000, scoped, tag = 'input window, operand 0, single buffered']
    #allocation3 [shape = 's32[1]{0}', space=sflag, size = 0x4, scoped, tag = 'scoped memory for tpu_custom_call.1']
    #allocation4 [shape = 's32[1]{0}', space=sflag, size = 0x4, scoped, tag = 'scoped memory for tpu_custom_call.1']
    #allocation5 [shape = 'u8[49152]{0}', space=vmem, size = 0xc000, scoped, tag = 'input window, operand 1, single buffered']
    #allocation6 [shape = 's32[1]{0}', space=sflag, size = 0x4, scoped, tag = 'scoped memory for tpu_custom_call.1']
    #allocation7 [shape = 'u8[8192]{0}', space=vmem, size = 0x2000, scoped, tag = 'output window, operand 0, single buffered']
    %8 = vsyncpa [#allocation3], 0
    %9 = vsyncpa [#allocation6], 0
    %10 = vsyncpa [#allocation4], 0
    // Predicated region
    $region2: #{tpu_custom_call.1} parent=1 // pred_check
      _
    $region3: #{tpu_custom_call.1} parent=1 // pred_check_branch
      %12 = sbr.rel (0) target = $region5
    $region4: #{tpu_custom_call.1} parent=1 // pred_region
      %s14 = ssub.s32 256, 256
      %15 = vsyncadd [#allocation3], %s14
      %s16 = sshll.u32 [#allocation2], 4
      %s17 = int_to_ptr.vmem [resolvable:$true] %s16
      %22 = dma.hbm_to_vmem [thread:$0]  %s0, 256, %s17, [#allocation3], 128, 128, 8
    $region5: #{tpu_custom_call.1} parent=1 // pred_fallthru
      _
    // Predicated region
    $region6: #{tpu_custom_call.1} parent=1 // pred_check
      _
    $region7: #{tpu_custom_call.1} parent=1 // pred_check_branch
      %24 = sbr.rel (0) target = $region9
    $region8: #{tpu_custom_call.1} parent=1 // pred_region
      %s26 = ssub.s32 1536, 1536
      %27 = vsyncadd [#allocation6], %s26
      %s28 = sshll.u32 [#allocation5], 4
      %s29 = int_to_ptr.vmem [resolvable:$true] %s28
      %34 = dma.hbm_to_vmem [thread:$0]  %s1, 1536, %s29, [#allocation6], 64, 64, 4
    $region9: #{tpu_custom_call.1} parent=1 // pred_fallthru
      _
    // Predicated region
    $region10: #{tpu_custom_call.1} parent=1 // pred_check
      _
    $region11: #{tpu_custom_call.1} parent=1 // pred_check_branch
      %36 = sbr.rel (0) target = $region13
    $region12: #{tpu_custom_call.1} parent=1 // pred_region
      _
    $region13: #{tpu_custom_call.1} parent=1 // pred_fallthru
      _
    // Predicated region
    $region14: #{tpu_custom_call.1} parent=1 // pred_check
      _
    $region15: #{tpu_custom_call.1} parent=1 // pred_check_branch
      %38 = sbr.rel (0) target = $region17
    $region16: #{tpu_custom_call.1} parent=1 // pred_region
      %39 = dma.done [#allocation3], 256
    $region17: #{tpu_custom_call.1} parent=1 // pred_fallthru
      _
    // Predicated region
    $region18: #{tpu_custom_call.1} parent=1 // pred_check
      _
    $region19: #{tpu_custom_call.1} parent=1 // pred_check_branch
      %41 = sbr.rel (0) target = $region21
    $region20: #{tpu_custom_call.1} parent=1 // pred_region
      %42 = dma.done [#allocation6], 1536
    $region21: #{tpu_custom_call.1} parent=1 // pred_fallthru
      _
    %v44 = vld [vmem:[#allocation2] sm:$0xff]
    %v45 = vld [vmem:[#allocation2 + $0x8] sm:$0xff]
    %v46 = vld [vmem:[#allocation5] sm:$0xf]
    %v47 = vld [vmem:[#allocation5 + $0x4] sm:$0xf]
    %v48 = vld [vmem:[#allocation5 + $0x8] sm:$0xf]
    %v49 = vld [vmem:[#allocation5 + $0xc] sm:$0xf]
    %v50 = vld [vmem:[#allocation5 + $0x10] sm:$0xf]
    %v51 = vld [vmem:[#allocation5 + $0x14] sm:$0xf]
    %v52 = vld [vmem:[#allocation5 + $0x18] sm:$0xf]
    %v53 = vld [vmem:[#allocation5 + $0x1c] sm:$0xf]
    %v54 = vld [vmem:[#allocation5 + $0x20] sm:$0xf]
    %v55 = vld [vmem:[#allocation5 + $0x24] sm:$0xf]
    %v56 = vld [vmem:[#allocation5 + $0x28] sm:$0xf]
    %v57 = vld [vmem:[#allocation5 + $0x2c] sm:$0xf]
    %v58 = vld [vmem:[#allocation5 + $0x30] sm:$0xf]
    %v59 = vld [vmem:[#allocation5 + $0x34] sm:$0xf]
    %v60 = vld [vmem:[#allocation5 + $0x38] sm:$0xf]
    %v61 = vld [vmem:[#allocation5 + $0x3c] sm:$0xf]
    %v62 = vld [vmem:[#allocation5 + $0x40] sm:$0xf]
    %v63 = vld [vmem:[#allocation5 + $0x44] sm:$0xf]
    %v64 = vld [vmem:[#allocation5 + $0x48] sm:$0xf]
    %v65 = vld [vmem:[#allocation5 + $0x4c] sm:$0xf]
    %v66 = vld [vmem:[#allocation5 + $0x50] sm:$0xf]
    %v67 = vld [vmem:[#allocation5 + $0x54] sm:$0xf]
    %v68 = vld [vmem:[#allocation5 + $0x58] sm:$0xf]
    %v69 = vld [vmem:[#allocation5 + $0x5c] sm:$0xf]
    %v70 = vld [vmem:[%s2] sm:$0x1]
    %v72 = vlaneseq
    %v73 = vshrl.u32 %v72, 7
    %v74 = vsub.s32 0, %v73
    %v75 = vrot.slane %v70, %v74
    %v79 = vunpack.c.l.b16 %v44
    %v80 = vunpack.c.h.b16 %v44
    %v81 = vunpack.c.l.b16 %v45
    %v82 = vunpack.c.h.b16 %v45
    %v83 = vpack.c.b16 %v81, %v79
    %v84 = vpack.c.b16 %v82, %v80
    %v110 = vunpack.c.l.b16 %v46
    %v111 = vunpack.c.l.b16 %v47
    %v112 = vunpack.c.l.b16 %v48
    %v113 = vunpack.c.l.b16 %v49
    %v114 = vunpack.c.l.b16 %v50
    %v115 = vunpack.c.l.b16 %v51
    %v116 = vunpack.c.l.b16 %v52
    %v117 = vunpack.c.l.b16 %v53
    %v118 = vunpack.c.l.b16 %v54
    %v119 = vunpack.c.l.b16 %v55
    %v120 = vunpack.c.l.b16 %v56
    %v121 = vunpack.c.l.b16 %v57
    %v122 = vunpack.c.l.b16 %v58
    %v123 = vunpack.c.l.b16 %v59
    %v124 = vunpack.c.l.b16 %v60
    %v125 = vunpack.c.l.b16 %v61
    %v126 = vunpack.c.l.b16 %v62
    %v127 = vunpack.c.l.b16 %v63
    %v128 = vunpack.c.l.b16 %v64
    %v129 = vunpack.c.l.b16 %v65
    %v130 = vunpack.c.l.b16 %v66
    %v131 = vunpack.c.l.b16 %v67
    %v132 = vunpack.c.l.b16 %v68
    %v133 = vunpack.c.l.b16 %v69
    %v134 = vpack.c.b16 %v111, %v110
    %v135 = vpack.c.b16 %v113, %v112
    %v136 = vpack.c.b16 %v115, %v114
    %v137 = vpack.c.b16 %v117, %v116
    %v138 = vpack.c.b16 %v119, %v118
    %v139 = vpack.c.b16 %v121, %v120
    %v140 = vpack.c.b16 %v123, %v122
    %v141 = vpack.c.b16 %v125, %v124
    %v142 = vpack.c.b16 %v127, %v126
    %v143 = vpack.c.b16 %v129, %v128
    %v144 = vpack.c.b16 %v131, %v130
    %v145 = vpack.c.b16 %v133, %v132
    %vm158 = vcmask 523264
    %v160 = vsel %vm158, %v84, 0
    %162 = vmatprep.subr.bf16.mxu0 0
    %163 = vmatpush1.bf16.msra.mxu0 %v134
    %164 = vmatprep.subr.bf16.mxu0 0
    %165 = vmatpush1.bf16.msra.mxu0 %v135
    %166 = vmatprep.subr.bf16.mxu0 0
    %167 = vmatpush1.bf16.msra.mxu0 %v136
    %168 = vmatprep.subr.bf16.mxu0 0
    %169 = vmatpush1.bf16.msra.mxu0 %v137
    %170 = vmatprep.subr.bf16.mxu0 0
    %171 = vmatpush1.bf16.msra.mxu0 %v138
    %172 = vmatprep.subr.bf16.mxu0 0
    %173 = vmatpush1.bf16.msra.mxu0 %v139
    %174 = vmatprep.subr.bf16.mxu0 0
    %175 = vmatpush1.bf16.msra.mxu0 %v140
    %176 = vmatprep.subr.bf16.mxu0 0
    %177 = vmatpush1.bf16.msra.mxu0 %v141
    %178 = vmatprep.subr.bf16.mxu0 0
    %179 = vmatpush1.bf16.msra.mxu0 %v142
    %180 = vmatprep.subr.bf16.mxu0 0
    %181 = vmatpush1.bf16.msra.mxu0 %v143
    %182 = vmatprep.subr.bf16.mxu0 0
    %183 = vmatpush1.bf16.msra.mxu0 %v144
    %184 = vmatprep.subr.bf16.mxu0 0
    %185 = vmatpush1.bf16.msra.mxu0 %v145
    %186 = vmatprep.subr.bf16.mxu0 0
    %187 = vmatpush1.bf16.msra.mxu0 0
    %188 = vmatprep.subr.bf16.mxu0 0
    %189 = vmatpush1.bf16.msra.mxu0 0
    %190 = vmatprep.subr.bf16.mxu0 0
    %191 = vmatpush1.bf16.msra.mxu0 0
    %192 = vmatprep.subr.bf16.mxu0 0
    %193 = vmatpush1.bf16.msra.mxu0 0
    %194 = vmatprep.mubr.bf16.mxu0 %v160
    %195 = vmatmul.mubr.bf16.gmra.mrb[0].mxu0 %v83
    %v196 = vpop.f32.mrb[0].mxu0
    %v197 = vadd.f32 %v75, %v196
    %v198 = vpop.f32.mrb[0].mxu0
    %v199 = vpop.f32.mrb[0].mxu0
    %v200 = vadd.f32 %v75, %v199
    %v201 = vpop.f32.mrb[0].mxu0
    %202 = vdwg.mxu0
    %vm203 = vcmp.gt.f32.partialorder %v197, 0.01
    %vm204 = vcmp.gt.f32.partialorder %v200, 0.01
    %v205 = vsub.f32 %v197, 0.01
    %v206 = vsub.f32 %v200, 0.01
    %vm207 = vcmp.lt.f32.partialorder %v197, -0.01
    %vm208 = vcmp.lt.f32.partialorder %v200, -0.01
    %v209 = vadd.f32 %v197, 0.01
    %v210 = vadd.f32 %v200, 0.01
    %v211 = vsel %vm207, %v209, 0.0
    %v212 = vsel %vm208, %v210, 0.0
    %v213 = vsel %vm203, %v205, %v211
    %v214 = vsel %vm204, %v206, %v212
    %215 = vst [vmem:[#allocation7] sm:$0xff] %v213
    %216 = vst [vmem:[#allocation7 + $0x8] sm:$0xff] %v214
    // Predicated region
    $region22: #{tpu_custom_call.1} parent=1 // pred_check
      _
    $region23: #{tpu_custom_call.1} parent=1 // pred_check_branch
      %218 = sbr.rel (0) target = $region25
    $region24: #{tpu_custom_call.1} parent=1 // pred_region
      %s220 = ssub.s32 256, 256
      %221 = vsyncadd [#allocation4], %s220
      %s222 = sshll.u32 [#allocation7], 4
      %s223 = int_to_ptr.vmem [resolvable:$true] %s222
      %228 = dma.vmem_to_hbm [thread:$0]  %s223, 256, %s3, [#allocation4], 128, 128, 8
    $region25: #{tpu_custom_call.1} parent=1 // pred_fallthru
      _
    // Predicated region
    $region26: #{tpu_custom_call.1} parent=1 // pred_check
      _
    $region27: #{tpu_custom_call.1} parent=1 // pred_check_branch
      %230 = sbr.rel (0) target = $region29
    $region28: #{tpu_custom_call.1} parent=1 // pred_region
      %231 = dma.done [#allocation4], 256
    $region29: #{tpu_custom_call.1} parent=1 // pred_fallthru
      _
    %232 = vsyncpa [#allocation3], 1
    %233 = vsyncpa [#allocation6], 1
    %234 = vsyncpa [#allocation4], 1

</llo_original>
